<compile_context>
chip_gen: v7x
topology: tpu7x:2x2x1
jax: 0.10.0
libtpu: 0.0.40
codegen_flags: <defaults>
</compile_context>

<pallas_src>
import functools

import jax
import jax.numpy as jnp
from jax.experimental import pallas as pl
from jax.experimental.pallas import tpu as pltpu


def _chip_info():
    """Returns (vmem_capacity_bytes, tensorcores_per_chip) with safe fallbacks."""
    vmem_cap = None
    cores = None
    try:
        info = pltpu.get_tpu_info()
        vmem_cap = int(info.vmem_capacity_bytes)
        for attr in ("num_tensorcores", "tensorcores_per_chip", "num_cores",
                     "core_count"):
            v = getattr(info, attr, None)
            if isinstance(v, int) and v > 0:
                cores = v
                break
    except Exception:
        pass
    kind = ""
    try:
        kind = jax.devices()[0].device_kind.lower()
    except Exception:
        pass
    is_v7 = "v7" in kind
    if vmem_cap is None:
        # v7x has 64 MiB / TC; v5e/v6e have 128 MiB.
        vmem_cap = (64 if is_v7 else 128) * 1024 * 1024
    if cores is None:
        cores = 2 if is_v7 else 1
    return vmem_cap, cores


def _ce_loss_kernel(logits_ref, targets_ref, tw_ref, out_ref,
                    *, n_rows, tile_n, tiles_per_core):
    """One (tile_n, C) logits tile per grid step; scalar accumulation into out."""
    ci = pl.program_id(0)          # core-split index
    j = pl.program_id(1)           # tile index within this core ("arbitrary")

    @pl.when(j == 0)
    def _():
        out_ref[...] = jnp.zeros_like(out_ref)

    x = logits_ref[...].astype(jnp.float32)        # (TN, C)  in-kernel upcast
    t = targets_ref[...]                           # (TN, 1)  int32
    tw = tw_ref[...]                               # (TN, 1)  f32, pre-masked
    tn, nc = x.shape

    # Logical (unclamped) global row index of each sublane in this tile.
    # Rows >= n_rows (tail overrun / duplicated clamped tile) are masked out.
    base = (ci * tiles_per_core + j) * tile_n
    row_idx = base + jax.lax.broadcasted_iota(jnp.int32, (tn, 1), 0)
    in_range = row_idx < n_rows

    # Numerically-stable log-sum-exp over the class (lane) axis.
    m = jnp.max(x, axis=-1, keepdims=True)                              # (TN,1)
    lse = m + jnp.log(jnp.sum(jnp.exp(x - m), axis=-1, keepdims=True))  # (TN,1)

    # Gather the target logit via a one-hot select (weight gather was hoisted
    # to the wrapper).  Ignored / OOB targets never match -> x_t = 0, and their
    # pre-masked weight tw = 0, so they contribute exactly 0.
    col = jax.lax.broadcasted_iota(jnp.int32, (tn, nc), 1)
    x_t = jnp.sum(jnp.where(col == t, x, 0.0), axis=-1, keepdims=True)  # (TN,1)

    # Masked rows contribute exactly 0 (select semantics keep NaN/Inf out).
    loss_rows = jnp.where(in_range, tw * (lse - x_t), 0.0)              # (TN,1)
    w_rows = jnp.where(in_range, tw, 0.0)                               # (TN,1)

    loss_s = jnp.sum(loss_rows)
    w_s = jnp.sum(w_rows)

    # Lane-dense accumulation into the resident output block: lane 0 = loss
    # partial sum, lane 1 = weight partial sum.
    lane = jax.lax.broadcasted_iota(jnp.int32, (1, 1, 128), 2)
    out_ref[...] += jnp.where(lane == 0, loss_s,
                              jnp.where(lane == 1, w_s, 0.0))


def ce_loss_pallas(logits, targets, weight=None, *, ignore_index=-100,
                   reduction="mean", tile_n=None):
    """Weighted cross-entropy matching torch CrossEntropyLoss semantics."""
    if reduction not in ("mean", "sum"):
        # TODO(synk): reduction='none' (per-sample loss vector output) not implemented.
        raise NotImplementedError("only 'mean' and 'sum' reductions supported")

    # torch accepts (N, C, d1, d2, ...) logits; flatten spatial dims to rows.
    if logits.ndim > 2:
        c0 = logits.shape[1]
        logits = jnp.moveaxis(logits, 1, -1).reshape(-1, c0)
        targets = targets.reshape(-1)
    n, c = logits.shape

    if weight is None:
        weight = jnp.ones((c,), jnp.float32)
    weight = weight.astype(jnp.float32)

    # Hoisted per-row class-weight gather (cheap O(N) XLA work), pre-masked so
    # ignored or out-of-range targets contribute exactly zero loss and weight.
    targets = targets.astype(jnp.int32)
    valid = (targets != ignore_index) & (targets >= 0) & (targets < c)
    safe_t = jnp.where(valid, targets, 0)
    tw = jnp.where(valid, weight[safe_t], 0.0).astype(jnp.float32)

    targets_2d = targets.reshape(n, 1)
    tw_2d = tw.reshape(n, 1)

    # --- per-chip VMEM budgeting ---
    vmem_cap, cores = _chip_info()
    vmem_limit = int(vmem_cap * 0.70)          # ~45 MiB on v7x, ~90 MiB on v5e/v6e

    el_bytes = jnp.dtype(logits.dtype).itemsize
    if tile_n is None:
        data_budget = vmem_limit - (4 << 20)   # headroom: output acc, internal scratch
        # Per-row VMEM cost: double-buffered native logits + one f32 upcast
        # temporary + lane-padded (512 B/row) targets & tw tiles, double-buffered.
        per_row = c * (2 * el_bytes + 4) + 2 * 2 * 512
        tile_n = data_budget // per_row
        tile_n = max(8, min(32768, (tile_n // 8) * 8))
    tile_n = max(8, (tile_n // 8) * 8)                   # (8,128) sublane rule
    tile_n = min(tile_n, ((n + 7) // 8) * 8)             # don't exceed data size

    n_tiles = pl.cdiv(n, tile_n)
    # Only split across cores on multi-TC chips (v7x); pure overhead on 1-TC.
    split = 2 if (cores >= 2 and n_tiles >= 2) else 1
    half = pl.cdiv(n_tiles, split)                       # tiles per core

    if split == 1:
        def _row_block(ci, j):
            return (j, 0)
    else:
        def _row_block(ci, j):
            # Clamp so the (possibly) extra logical tile of the odd core re-reads
            # the last real tile; its rows are fully masked in-kernel (row >= n).
            return (jnp.minimum(ci * half + j, n_tiles - 1), 0)

    kernel = functools.partial(_ce_loss_kernel, n_rows=n, tile_n=tile_n,
                               tiles_per_core=half)

    def _run(first_axis_sem):
        return pl.pallas_call(
            kernel,
            out_shape=jax.ShapeDtypeStruct((split, 1, 128), jnp.float32),
            grid_spec=pltpu.PrefetchScalarGridSpec(
                num_scalar_prefetch=0,
                grid=(split, half),
                in_specs=[
                    pl.BlockSpec((tile_n, c), _row_block),   # logits (native dtype)
                    pl.BlockSpec((tile_n, 1), _row_block),   # targets (int32)
                    pl.BlockSpec((tile_n, 1), _row_block),   # per-row weights (f32)
                ],
                out_specs=pl.BlockSpec((1, 1, 128), lambda ci, j: (ci, 0, 0)),
            ),
            compiler_params=pltpu.CompilerParams(
                dimension_semantics=(first_axis_sem, pltpu.ARBITRARY),
                vmem_limit_bytes=vmem_limit),
        )(logits, targets_2d, tw_2d)

    if split > 1:
        # CORE_PARALLEL actually shards the leading axis across TensorCores on
        # v7x; fall back to plain PARALLEL if the compiler rejects it.
        try:
            out = _run(pltpu.CORE_PARALLEL)
        except Exception:
            out = _run(pltpu.PARALLEL)
    else:
        out = _run(pltpu.ARBITRARY)

    loss_total = jnp.sum(out[:, 0, 0])
    w_total = jnp.sum(out[:, 0, 1])
    if reduction == "sum":
        return loss_total
    # 'mean': NaN when every target is ignore_index (matches torch).
    return loss_total / w_total


def ce_loss_ref(logits, targets, weight, ignore_index=-100, reduction="mean"):
    """Pure-JAX reference (matches torch CrossEntropyLoss) on [N, C] inputs."""
    logits = logits.astype(jnp.float32)
    lse = jax.scipy.special.logsumexp(logits, axis=-1)
    valid = targets != ignore_index
    safe_t = jnp.where(valid, targets, 0).astype(jnp.int32)
    x_t = jnp.take_along_axis(logits, safe_t[:, None], axis=-1)[:, 0]
    w_t = weight[safe_t]
    loss = jnp.where(valid, w_t * (lse - x_t), 0.0)
    if reduction == "sum":
        return jnp.sum(loss)
    return jnp.sum(loss) / jnp.sum(jnp.where(valid, w_t, 0.0))


if __name__ == "__main__":
    key = jax.random.PRNGKey(0)
    ignore_index = -100

    # --- Test 1: 4-D segmentation-style logits (N, C, H, W), f32, explicit
    # small tile -> multi-tile grid, tail masking and cross-tile accumulation,
    # plus the core-split path on multi-TC chips. ---
    N, C, H, W = 2, 19, 16, 16
    k1, k2 = jax.random.split(key)
    logits4d = jax.random.normal(k1, (N, C, H, W), dtype=jnp.float32)
    targets3d = jax.random.randint(k2, (N, H, W), 0, C, dtype=jnp.int32)
    targets3d = targets3d.at[0, 0, :5].set(ignore_index)   # exercise ignore_index
    weight = 0.5 + 0.05 * jnp.arange(C, dtype=jnp.float32)

    flat_logits = jnp.moveaxis(logits4d, 1, -1).reshape(-1, C)
    flat_targets = targets3d.reshape(-1)

    loss = ce_loss_pallas(logits4d, targets3d, weight,
                          ignore_index=ignore_index, tile_n=48)
    jax.block_until_ready(loss)
    ref = ce_loss_ref(flat_logits, flat_targets, weight, ignore_index)
    assert jnp.allclose(loss, ref, atol=1e-4, rtol=1e-5), (loss, ref)

    loss_sum = ce_loss_pallas(logits4d, targets3d, weight,
                              ignore_index=ignore_index, reduction="sum",
                              tile_n=48)
    jax.block_until_ready(loss_sum)
    ref_sum = ce_loss_ref(flat_logits, flat_targets, weight, ignore_index,
                          reduction="sum")
    assert jnp.allclose(loss_sum, ref_sum, atol=1e-3, rtol=1e-5), (loss_sum, ref_sum)

    # --- Test 2: 2-D bf16 logits, auto (byte-budgeted) tile size, native-dtype
    # DMA with in-kernel f32 upcast, non-multiple-of-8 row count (tail mask). ---
    N2, C2 = 50, 128
    k3, k4 = jax.random.split(k1)
    logits_bf16 = jax.random.normal(k3, (N2, C2), dtype=jnp.float32).astype(jnp.bfloat16)
    targets2 = jax.random.randint(k4, (N2,), 0, C2, dtype=jnp.int32)
    targets2 = targets2.at[3].set(ignore_index).at[11].set(ignore_index)
    weight2 = 0.5 + 0.01 * jnp.arange(C2, dtype=jnp.float32)

    loss_bf16 = ce_loss_pallas(logits_bf16, targets2, weight2,
                               ignore_index=ignore_index)
    jax.block_until_ready(loss_bf16)
    ref_bf16 = ce_loss_ref(logits_bf16.astype(jnp.float32), targets2, weight2,
                           ignore_index=ignore_index)
    assert jnp.allclose(loss_bf16, ref_bf16, atol=1e-3, rtol=1e-3), (
        loss_bf16, ref_bf16)

    print("KERNEL_OK")
</pallas_src>

<mosaic_0001>
module attributes {stable_mosaic.version = 11 : i64} {
  func.func @_ce_loss_kernel(%arg0: i32, %arg1: i32, %arg2: memref<48x19xf32, #tpu.memory_space<vmem>>, %arg3: memref<48x1xi32, #tpu.memory_space<vmem>>, %arg4: memref<48x1xf32, #tpu.memory_space<vmem>>, %arg5: memref<1x1x128xf32, #tpu.memory_space<vmem>>) attributes {dimension_semantics = [#tpu.dimension_semantics<arbitrary>, #tpu.dimension_semantics<arbitrary>], iteration_bounds = array<i64: 1, 11>, scalar_prefetch = 0 : i64, scratch_operands = 0 : i64, tpu.core_type = #tpu.core_type<tc>, window_params = [{transform_indices = @transform_0, window_bounds = array<i64: 48, 19>}, {transform_indices = @transform_1, window_bounds = array<i64: 48, 1>}, {transform_indices = @transform_2, window_bounds = array<i64: 48, 1>}, {transform_indices = @transform_3, window_bounds = array<i64: 1, 1, 128>}]} {
    %c0_i32 = arith.constant 0 : i32
    %0 = arith.cmpi eq, %arg1, %c0_i32 : i32
    %1 = arith.extui %0 : i1 to i32
    %c0_i32_0 = arith.constant 0 : i32
    %2 = arith.cmpi ne, %1, %c0_i32_0 : i32
    scf.if %2 {
      %cst_21 = arith.constant 0.000000e+00 : f32
      %57 = vector.broadcast %cst_21 : f32 to vector<1x1x128xf32>
      %c0_22 = arith.constant 0 : index
      %c0_23 = arith.constant 0 : index
      %c0_24 = arith.constant 0 : index
      %58 = vector.load %arg5[%c0_22, %c0_23, %c0_24] : memref<1x1x128xf32, #tpu.memory_space<vmem>>, vector<1x1x128xf32>
      tpu.vector_store %arg5[%c0_22, %c0_23, %c0_24], %57 {strides = array<i32>} : memref<1x1x128xf32, #tpu.memory_space<vmem>>, vector<1x1x128xf32>,
    } else {
    }
    %c0 = arith.constant 0 : index
    %c0_1 = arith.constant 0 : index
    %3 = vector.load %arg2[%c0, %c0_1] : memref<48x19xf32, #tpu.memory_space<vmem>>, vector<48x19xf32>
    %c0_2 = arith.constant 0 : index
    %c0_3 = arith.constant 0 : index
    %4 = vector.load %arg3[%c0_2, %c0_3] : memref<48x1xi32, #tpu.memory_space<vmem>>, vector<48x1xi32>
    %c0_4 = arith.constant 0 : index
    %c0_5 = arith.constant 0 : index
    %5 = vector.load %arg4[%c0_4, %c0_5] : memref<48x1xf32, #tpu.memory_space<vmem>>, vector<48x1xf32>
    %c11_i32 = arith.constant 11 : i32
    %6 = arith.muli %arg0, %c11_i32 : i32
    %7 = arith.addi %6, %arg1 : i32
    %c48_i32 = arith.constant 48 : i32
    %8 = arith.muli %7, %c48_i32 : i32
    %9 = tpu.iota {dimensions = array<i32: 0>} : vector<48x1xi32>
    %10 = vector.broadcast %8 : i32 to vector<48x1xi32>
    %11 = arith.addi %10, %9 : vector<48x1xi32>
    %c512_i32 = arith.constant 512 : i32
    %12 = vector.broadcast %c512_i32 : i32 to vector<48x1xi32>
    %13 = arith.cmpi slt, %11, %12 : vector<48x1xi32>
    %cst = arith.constant dense<0xFF800000> : vector<48xf32>
    %14 = vector.multi_reduction <maximumf>, %3, %cst [1] : vector<48x19xf32> to vector<48xf32>
    %15 = vector.shape_cast %14 : vector<48xf32> to vector<48x1xf32>
    %16 = vector.broadcast %15 : vector<48x1xf32> to vector<48x19xf32>
    %17 = arith.subf %3, %16 : vector<48x19xf32>
    %18 = math.exp %17 : vector<48x19xf32>
    %cst_6 = arith.constant dense<0.000000e+00> : vector<48xf32>
    %19 = vector.multi_reduction <add>, %18, %cst_6 [1] : vector<48x19xf32> to vector<48xf32>
    %20 = vector.shape_cast %19 : vector<48xf32> to vector<48x1xf32>
    %21 = math.log %20 : vector<48x1xf32>
    %22 = arith.addf %15, %21 : vector<48x1xf32>
    %23 = tpu.iota {dimensions = array<i32: 1>} : vector<48x19xi32>
    %24 = vector.broadcast %4 : vector<48x1xi32> to vector<48x19xi32>
    %25 = arith.cmpi eq, %23, %24 : vector<48x19xi32>
    %cst_7 = arith.constant 0.000000e+00 : f32
    %26 = vector.broadcast %cst_7 : f32 to vector<48x19xf32>
    %27 = arith.select %25, %3, %26 : vector<48x19xi1>, vector<48x19xf32>
    %cst_8 = arith.constant dense<0.000000e+00> : vector<48xf32>
    %28 = vector.multi_reduction <add>, %27, %cst_8 [1] : vector<48x19xf32> to vector<48xf32>
    %29 = vector.shape_cast %28 : vector<48xf32> to vector<48x1xf32>
    %30 = arith.subf %22, %29 : vector<48x1xf32>
    %31 = arith.mulf %5, %30 : vector<48x1xf32>
    %cst_9 = arith.constant 0.000000e+00 : f32
    %32 = vector.broadcast %cst_9 : f32 to vector<48x1xf32>
    %33 = arith.select %13, %31, %32 : vector<48x1xi1>, vector<48x1xf32>
    %cst_10 = arith.constant 0.000000e+00 : f32
    %34 = vector.broadcast %cst_10 : f32 to vector<48x1xf32>
    %35 = arith.select %13, %5, %34 : vector<48x1xi1>, vector<48x1xf32>
    %36 = vector.shape_cast %33 : vector<48x1xf32> to vector<1x48x1xf32>
    %cst_11 = arith.constant dense<0.000000e+00> : vector<1xf32>
    %37 = vector.multi_reduction <add>, %36, %cst_11 [1, 2] : vector<1x48x1xf32> to vector<1xf32>
    %38 = vector.shape_cast %37 : vector<1xf32> to vector<1x1x1xf32>
    %39 = vector.extract %38[0, 0, 0] : f32 from vector<1x1x1xf32>
    %40 = vector.shape_cast %35 : vector<48x1xf32> to vector<1x48x1xf32>
    %cst_12 = arith.constant dense<0.000000e+00> : vector<1xf32>
    %41 = vector.multi_reduction <add>, %40, %cst_12 [1, 2] : vector<1x48x1xf32> to vector<1xf32>
    %42 = vector.shape_cast %41 : vector<1xf32> to vector<1x1x1xf32>
    %43 = vector.extract %42[0, 0, 0] : f32 from vector<1x1x1xf32>
    %44 = tpu.iota {dimensions = array<i32: 2>} : vector<1x1x128xi32>
    %c0_13 = arith.constant 0 : index
    %c0_14 = arith.constant 0 : index
    %c0_15 = arith.constant 0 : index
    %45 = vector.load %arg5[%c0_13, %c0_14, %c0_15] : memref<1x1x128xf32, #tpu.memory_space<vmem>>, vector<1x1x128xf32>
    %c0_i32_16 = arith.constant 0 : i32
    %46 = vector.broadcast %c0_i32_16 : i32 to vector<1x1x128xi32>
    %47 = arith.cmpi eq, %44, %46 : vector<1x1x128xi32>
    %c1_i32 = arith.constant 1 : i32
    %48 = vector.broadcast %c1_i32 : i32 to vector<1x1x128xi32>
    %49 = arith.cmpi eq, %44, %48 : vector<1x1x128xi32>
    %cst_17 = arith.constant 0.000000e+00 : f32
    %50 = vector.broadcast %43 : f32 to vector<1x1x128xf32>
    %51 = vector.broadcast %cst_17 : f32 to vector<1x1x128xf32>
    %52 = arith.select %49, %50, %51 : vector<1x1x128xi1>, vector<1x1x128xf32>
    %53 = vector.broadcast %39 : f32 to vector<1x1x128xf32>
    %54 = arith.select %47, %53, %52 : vector<1x1x128xi1>, vector<1x1x128xf32>
    %55 = arith.addf %45, %54 : vector<1x1x128xf32>
    %c0_18 = arith.constant 0 : index
    %c0_19 = arith.constant 0 : index
    %c0_20 = arith.constant 0 : index
    %56 = vector.load %arg5[%c0_18, %c0_19, %c0_20] : memref<1x1x128xf32, #tpu.memory_space<vmem>>, vector<1x1x128xf32>
    tpu.vector_store %arg5[%c0_18, %c0_19, %c0_20], %55 {strides = array<i32>} : memref<1x1x128xf32, #tpu.memory_space<vmem>>, vector<1x1x128xf32>,
    return
  }
  func.func @transform_0(%arg0: i32, %arg1: i32) -> (i32, i32) {
    %c0_i32 = arith.constant 0 : i32
    %c0_i32_0 = arith.constant 0 : i32
    return %arg1, %c0_i32 : i32, i32
  }
  func.func @transform_1(%arg0: i32, %arg1: i32) -> (i32, i32) {
    %c0_i32 = arith.constant 0 : i32
    %c0_i32_0 = arith.constant 0 : i32
    return %arg1, %c0_i32 : i32, i32
  }
  func.func @transform_2(%arg0: i32, %arg1: i32) -> (i32, i32) {
    %c0_i32 = arith.constant 0 : i32
    %c0_i32_0 = arith.constant 0 : i32
    return %arg1, %c0_i32 : i32, i32
  }
  func.func @transform_3(%arg0: i32, %arg1: i32) -> (i32, i32, i32) {
    %c0_i32 = arith.constant 0 : i32
    %c0_i32_0 = arith.constant 0 : i32
    %c0_i32_1 = arith.constant 0 : i32
    return %arg0, %c0_i32, %c0_i32_0 : i32, i32, i32
  }
}

</mosaic_0001>

<llo_original>
// kernel: tpu_custom_call.1
$region0: #{tpu_custom_call.1}
  #allocation0 [shape = 'u32[]', space=smem, size = 0x4, offset = 0x4, fixed_abs, tag = 'smem constant byte address 0x4 - core index']
  #allocation1 [shape = 'u32[144,128]{1,0:T(1,128)}', space=vmem, size = 0x12000, scoped, tag = 'internal scratch']
  %s0 = inlined_call_operand.hbm [shape: f32[512,19], index: 0, kind: input, shape index: {}]
  %s1 = inlined_call_operand.hbm [shape: s32[512,1], index: 1, kind: input, shape index: {}]
  %s2 = inlined_call_operand.hbm [shape: f32[512,1], index: 2, kind: input, shape index: {}]
  %s3 = inlined_call_operand.hbm [shape: f32[1,1,128], index: 3, kind: output, shape index: {}]
  %s4 = sld [smem:[#allocation0]]
  $region61: #{tpu_custom_call.1} parent=0
    _
  %s6 = ssub.s32 1, %s4
  %s7 = scalar_select 0, %s6, %s4
  $region1: #{tpu_custom_call.1} parent=0
    #allocation2 [shape = 'u8[49152]{0}', space=vmem, size = 0xc000, scoped, tag = 'input window, operand 0']
    #allocation3 [shape = 's32[2]{0}', space=sflag, size = 0x8, scoped, tag = 'scoped memory for tpu_custom_call.1']
    #allocation4 [shape = 's32[2]{0}', space=sflag, size = 0x8, scoped, tag = 'scoped memory for tpu_custom_call.1']
    #allocation5 [shape = 'u8[49152]{0}', space=vmem, size = 0xc000, scoped, tag = 'input window, operand 1']
    #allocation6 [shape = 's32[2]{0}', space=sflag, size = 0x8, scoped, tag = 'scoped memory for tpu_custom_call.1']
    #allocation7 [shape = 'u8[49152]{0}', space=vmem, size = 0xc000, scoped, tag = 'input window, operand 2']
    #allocation8 [shape = 'u8[512]{0}', space=vmem, size = 0x400, scoped, tag = 'output window, operand 0, single buffered']
    %8 = vsyncpa [#allocation3], 0
    %s9 = scalar_lea.sflag [#allocation3], 1
    %10 = vsyncpa %s9, 0
    %11 = vsyncpa [#allocation6], 0
    %s12 = scalar_lea.sflag [#allocation6], 1
    %13 = vsyncpa %s12, 0
    %14 = vsyncpa [#allocation4], 0
    loop: start=0, step=1, limit=13
    $region2: #{tpu_custom_call.1} parent=1 // loop_pre_header
      _
    $region3: #{tpu_custom_call.1} parent=1 // loop_header
      %s16 = sphi 0, %s20
      %p17 = scmp.ge.s32.totalorder %s16, 13
      %s23 = sphi 0, %s35
      %s24 = sphi 0, %s31
      %s25 = sphi 0, %s23
      %s26 = sphi 0, %s24
      %s27 = sphi 0, %s25
      %s28 = sphi 0, %s26
      %s38 = sphi 0, %s40
      %s41 = sphi 0, %s38
      %s42 = sphi 0, %s41
      %s58 = sphi 0, %s42
      %s64 = sphi 0, %s66
      %s67 = sphi 0, %s64
      %s68 = sphi 0, %s67
      %s84 = sphi 0, %s68
      %s90 = sphi 0, %s92
      %s93 = sphi 0, %s90
      %s94 = sphi 0, %s93
      %s110 = sphi 0, %s94
      %s116 = sphi 0, %s118
      %s119 = sphi 0, %s116
      %s120 = sphi 0, %s119
      %s136 = sphi 0, %s120
    $region4: #{tpu_custom_call.1} parent=1 // loop_header_branch
      %19 = sbr.rel (%p17) target = $region8
    $region5: #{tpu_custom_call.1} parent=1 // loop_body
      %s21 = ssub.s32 %s16, 1
      %s22 = ssub.s32 %s16, 2
      %s29 = sadd.s32 1, %s24
      %p30 = scmp.ge.s32.totalorder %s29, 11
      %s31 = scalar_select %p30, 0, %s29
      %s32 = sadd.s32 1, %s23
      %s33 = scalar_select %p30, %s32, %s23
      %p34 = scmp.ge.s32.totalorder %s33, 1
      %s35 = scalar_select %p34, 0, %s33
      %s36 = ssub.s32 %s24, %s31
      %p37 = scmp.eq.s32.totalorder %s36, 0
      %s39 = sadd.s32 %s38, 1
      %s40 = scalar_select %p37, %s38, %s39
      %p43 = pneg %p37
      %p44 = scmp.eq.s32.totalorder %s16, 10
      %p45 = por %p43, %p44
      %p46 = scmp.ne.s32.totalorder %s38, %s41
      %p47 = scmp.eq.s32.totalorder %s16, 0
      %p48 = por %p46, %p47
      %p49 = scmp.ne.s32.totalorder %s38, %s41
      %p50 = scmp.eq.s32.totalorder %s21, 10
      %p51 = por %p49, %p50
      %p52 = scmp.ne.s32.totalorder %s41, %s42
      %p53 = scmp.eq.s32.totalorder %s21, 0
      %p54 = por %p52, %p53
      %p55 = scmp.ne.s32.totalorder %s41, %s42
      %p56 = scmp.eq.s32.totalorder %s22, 10
      %p57 = por %p55, %p56
      %p59 = scmp.ne.s32.totalorder %s42, %s58
      %p60 = scmp.eq.s32.totalorder %s22, 0
      %p61 = por %p59, %p60
      %s62 = ssub.s32 %s24, %s31
      %p63 = scmp.eq.s32.totalorder %s62, 0
      %s65 = sadd.s32 %s64, 1
      %s66 = scalar_select %p63, %s64, %s65
      %p69 = pneg %p63
      %p70 = scmp.eq.s32.totalorder %s16, 10
      %p71 = por %p69, %p70
      %p72 = scmp.ne.s32.totalorder %s64, %s67
      %p73 = scmp.eq.s32.totalorder %s16, 0
      %p74 = por %p72, %p73
      %p75 = scmp.ne.s32.totalorder %s64, %s67
      %p76 = scmp.eq.s32.totalorder %s21, 10
      %p77 = por %p75, %p76
      %p78 = scmp.ne.s32.totalorder %s67, %s68
      %p79 = scmp.eq.s32.totalorder %s21, 0
      %p80 = por %p78, %p79
      %p81 = scmp.ne.s32.totalorder %s67, %s68
      %p82 = scmp.eq.s32.totalorder %s22, 10
      %p83 = por %p81, %p82
      %p85 = scmp.ne.s32.totalorder %s68, %s84
      %p86 = scmp.eq.s32.totalorder %s22, 0
      %p87 = por %p85, %p86
      %s88 = ssub.s32 %s24, %s31
      %p89 = scmp.eq.s32.totalorder %s88, 0
      %s91 = sadd.s32 %s90, 1
      %s92 = scalar_select %p89, %s90, %s91
      %p95 = pneg %p89
      %p96 = scmp.eq.s32.totalorder %s16, 10
      %p97 = por %p95, %p96
      %p98 = scmp.ne.s32.totalorder %s90, %s93
      %p99 = scmp.eq.s32.totalorder %s16, 0
      %p100 = por %p98, %p99
      %p101 = scmp.ne.s32.totalorder %s90, %s93
      %p102 = scmp.eq.s32.totalorder %s21, 10
      %p103 = por %p101, %p102
      %p104 = scmp.ne.s32.totalorder %s93, %s94
      %p105 = scmp.eq.s32.totalorder %s21, 0
      %p106 = por %p104, %p105
      %p107 = scmp.ne.s32.totalorder %s93, %s94
      %p108 = scmp.eq.s32.totalorder %s22, 10
      %p109 = por %p107, %p108
      %p111 = scmp.ne.s32.totalorder %s94, %s110
      %p112 = scmp.eq.s32.totalorder %s22, 0
      %p113 = por %p111, %p112
      %s114 = ssub.s32 %s23, %s35
      %p115 = scmp.eq.s32.totalorder %s114, 0
      %s117 = sadd.s32 %s116, 1
      %s118 = scalar_select %p115, %s116, %s117
      %p121 = pneg %p115
      %p122 = scmp.eq.s32.totalorder %s16, 10
      %p123 = por %p121, %p122
      %p124 = scmp.ne.s32.totalorder %s116, %s119
      %p125 = scmp.eq.s32.totalorder %s16, 0
      %p126 = por %p124, %p125
      %p127 = scmp.ne.s32.totalorder %s116, %s119
      %p128 = scmp.eq.s32.totalorder %s21, 10
      %p129 = por %p127, %p128
      %p130 = scmp.ne.s32.totalorder %s119, %s120
      %p131 = scmp.eq.s32.totalorder %s21, 0
      %p132 = por %p130, %p131
      %p133 = scmp.ne.s32.totalorder %s119, %s120
      %p134 = scmp.eq.s32.totalorder %s22, 10
      %p135 = por %p133, %p134
      %p137 = scmp.ne.s32.totalorder %s120, %s136
      %p138 = scmp.eq.s32.totalorder %s22, 0
      %p139 = por %p137, %p138
      %p140 = scmp.le.s32.totalorder 1, %s16
      %p141 = scmp.lt.s32.totalorder %s16, 12
      %p142 = pnand %p140, %p141
      %p143 = pneg %p142
      // Predicated region
      $region9: #{tpu_custom_call.1} parent=5 // pred_check
        _
      $region10: #{tpu_custom_call.1} parent=5 // pred_check_branch
        %145 = sbr.rel (%p142) target = $region12
      $region11: #{tpu_custom_call.1} parent=5 // pred_region
        %s146 = ssub.s32 %s16, 1
      $region12: #{tpu_custom_call.1} parent=5 // pred_fallthru
        _
      %p147 = scmp.lt.s32.totalorder %s16, 11
      // Predicated region
      $region13: #{tpu_custom_call.1} parent=5 // pred_check
        %p148 = pneg %p147
      $region14: #{tpu_custom_call.1} parent=5 // pred_check_branch
        %150 = sbr.rel (%p148) target = $region16
      $region15: #{tpu_custom_call.1} parent=5 // pred_region
        // Predicated region
        $region17: #{tpu_custom_call.1} parent=15 // pred_check
          %p151 = pneg %p48
        $region18: #{tpu_custom_call.1} parent=15 // pred_check_branch
          %153 = sbr.rel (%p151) target = $region20
        $region19: #{tpu_custom_call.1} parent=15 // pred_region
          %s154 = sand.u32 %s38, 1
          %s155 = scalar_lea.sflag [#allocation3], %s154
          %s156 = sand.u32 %s38, 1
          %s157 = smul.addr %s156, 48
          %s158 = scalar_lea.vmem [#allocation2], %s157
          %s159 = smul.u32 6, %s24
          %s160 = ssub.s32 64, %s159
          %p161 = scmp.lt.s32.totalorder %s160, 6
          %s162 = scalar_select %p161, %s160, 6
          %s163 = smul.u32 128, %s162
          %s165 = ssub.s32 768, %s163
          %166 = vsyncadd %s155, %s165
          %p167 = scmp.ne.s32.totalorder 0, %s163
          %s168 = smul.addr %s159, 128
          %s169 = scalar_lea.hbm %s0, %s168
          %s170 = smul.u32 8, %s162
          %s171 = sshll.u32 %s158, 4
          %s172 = int_to_ptr.vmem [resolvable:$true] %s171
          %s173 = sshll.u32 %s170, 4
          %177 = dma.hbm_to_vmem [thread:$0]  (%p167), %s169, %s173, %s172, %s155, 128, 128, 8
        $region20: #{tpu_custom_call.1} parent=15 // pred_fallthru
          _
        // Predicated region
        $region21: #{tpu_custom_call.1} parent=15 // pred_check
          %p178 = pneg %p74
        $region22: #{tpu_custom_call.1} parent=15 // pred_check_branch
          %180 = sbr.rel (%p178) target = $region24
        $region23: #{tpu_custom_call.1} parent=15 // pred_region
          %s181 = sand.u32 %s16, 1
          %s182 = scalar_lea.sflag [#allocation6], %s181
          %s183 = sand.u32 %s64, 1
          %s184 = smul.addr %s183, 48
          %s185 = scalar_lea.vmem [#allocation5], %s184
          %s186 = smul.u32 6, %s24
          %s187 = ssub.s32 64, %s186
          %p188 = scmp.lt.s32.totalorder %s187, 6
          %s189 = scalar_select %p188, %s187, 6
          %s190 = smul.u32 128, %s189
          %s192 = ssub.s32 768, %s190
          %193 = vsyncadd %s182, %s192
          %p194 = scmp.ne.s32.totalorder 0, %s190
          %s195 = smul.addr %s186, 128
          %s196 = scalar_lea.hbm %s1, %s195
          %s197 = smul.u32 8, %s189
          %s198 = sshll.u32 %s185, 4
          %s199 = int_to_ptr.vmem [resolvable:$true] %s198
          %s200 = sshll.u32 %s197, 4
          %204 = dma.hbm_to_vmem [thread:$0]  (%p194), %s196, %s200, %s199, %s182, 128, 128, 8
        $region24: #{tpu_custom_call.1} parent=15 // pred_fallthru
          _
        // Predicated region
        $region25: #{tpu_custom_call.1} parent=15 // pred_check
          %p205 = pneg %p100
        $region26: #{tpu_custom_call.1} parent=15 // pred_check_branch
          %207 = sbr.rel (%p205) target = $region28
        $region27: #{tpu_custom_call.1} parent=15 // pred_region
          %s208 = sand.u32 %s16, 1
          %s209 = scalar_lea.sflag [#allocation6], %s208
          %s210 = sand.u32 %s90, 1
          %s211 = smul.addr %s210, 48
          %s212 = scalar_lea.vmem [#allocation7], %s211
          %s213 = smul.u32 6, %s24
          %s214 = ssub.s32 64, %s213
          %p215 = scmp.lt.s32.totalorder %s214, 6
          %s216 = scalar_select %p215, %s214, 6
          %s217 = smul.u32 128, %s216
          %s219 = ssub.s32 768, %s217
          %220 = vsyncadd %s209, %s219
          %p221 = scmp.ne.s32.totalorder 0, %s217
          %s222 = smul.addr %s213, 128
          %s223 = scalar_lea.hbm %s2, %s222
          %s224 = smul.u32 8, %s216
          %s225 = sshll.u32 %s212, 4
          %s226 = int_to_ptr.vmem [resolvable:$true] %s225
          %s227 = sshll.u32 %s224, 4
          %231 = dma.hbm_to_vmem [thread:$0]  (%p221), %s223, %s227, %s226, %s209, 128, 128, 8
        $region28: #{tpu_custom_call.1} parent=15 // pred_fallthru
          _
      $region16: #{tpu_custom_call.1} parent=5 // pred_fallthru
        _
      %p232 = scmp.le.s32.totalorder 1, %s16
      %p233 = scmp.lt.s32.totalorder %s16, 12
      %p234 = pnand %p232, %p233
      %p235 = pneg %p234
      // Predicated region
      $region29: #{tpu_custom_call.1} parent=5 // pred_check
        _
      $region30: #{tpu_custom_call.1} parent=5 // pred_check_branch
        %237 = sbr.rel (%p234) target = $region32
      $region31: #{tpu_custom_call.1} parent=5 // pred_region
        %s238 = ssub.s32 %s16, 1
        %s239 = sand.u32 %s41, 1
        %s240 = scalar_lea.sflag [#allocation3], %s239
        %s241 = sand.u32 %s41, 1
        %s242 = smul.addr %s241, 48
        %s243 = scalar_lea.vmem [#allocation2], %s242
        // Predicated region
        $region33: #{tpu_custom_call.1} parent=31 // pred_check
          %p244 = pneg %p54
        $region34: #{tpu_custom_call.1} parent=31 // pred_check_branch
          %246 = sbr.rel (%p244) target = $region36
        $region35: #{tpu_custom_call.1} parent=31 // pred_region
          %247 = dma.done %s240, 768
        $region36: #{tpu_custom_call.1} parent=31 // pred_fallthru
          _
        %s248 = sand.u32 %s21, 1
        %s249 = scalar_lea.sflag [#allocation6], %s248
        %s250 = sand.u32 %s67, 1
        %s251 = smul.addr %s250, 48
        %s252 = scalar_lea.vmem [#allocation5], %s251
        // Predicated region
        $region37: #{tpu_custom_call.1} parent=31 // pred_check
          %p253 = pneg %p80
        $region38: #{tpu_custom_call.1} parent=31 // pred_check_branch
          %255 = sbr.rel (%p253) target = $region40
        $region39: #{tpu_custom_call.1} parent=31 // pred_region
          %256 = dma.done %s249, 768
        $region40: #{tpu_custom_call.1} parent=31 // pred_fallthru
          _
        %s257 = sand.u32 %s21, 1
        %s258 = scalar_lea.sflag [#allocation6], %s257
        %s259 = sand.u32 %s93, 1
        %s260 = smul.addr %s259, 48
        %s261 = scalar_lea.vmem [#allocation7], %s260
        // Predicated region
        $region41: #{tpu_custom_call.1} parent=31 // pred_check
          %p262 = pneg %p106
        $region42: #{tpu_custom_call.1} parent=31 // pred_check_branch
          %264 = sbr.rel (%p262) target = $region44
        $region43: #{tpu_custom_call.1} parent=31 // pred_region
          %265 = dma.done %s258, 768
        $region44: #{tpu_custom_call.1} parent=31 // pred_fallthru
          _
        %s266 = sand.u32 %s41, 1
        %s267 = scalar_lea.sflag [#allocation3], %s266
        %s268 = sand.u32 %s41, 1
        %s269 = smul.addr %s268, 48
        %s270 = scalar_lea.vmem [#allocation2], %s269
        %p271 = pneg %p54
        %p272 = pneg %p51
        %s273 = sand.u32 %s21, 1
        %s274 = scalar_lea.sflag [#allocation6], %s273
        %s275 = sand.u32 %s67, 1
        %s276 = smul.addr %s275, 48
        %s277 = scalar_lea.vmem [#allocation5], %s276
        %p278 = pneg %p80
        %p279 = pneg %p77
        %s280 = sand.u32 %s21, 1
        %s281 = scalar_lea.sflag [#allocation6], %s280
        %s282 = sand.u32 %s93, 1
        %s283 = smul.addr %s282, 48
        %s284 = scalar_lea.vmem [#allocation7], %s283
        %p285 = pneg %p106
        %p286 = pneg %p103
        %p287 = pneg %p132
        %p288 = pneg %p129
        %s289 = smul.u32 6, %s26
        %s290 = ssub.s32 64, %s289
        %p291 = scmp.lt.s32.totalorder %s290, 6
        %s292 = scalar_select %p291, %s290, 6
        %s293 = smul.u32 128, %s292
        %s294 = smul.u32 6, %s26
        %s295 = ssub.s32 64, %s294
        %p296 = scmp.lt.s32.totalorder %s295, 6
        %s297 = scalar_select %p296, %s295, 6
        %s298 = smul.u32 128, %s297
        %s299 = smul.u32 6, %s26
        %s300 = ssub.s32 64, %s299
        %p301 = scmp.lt.s32.totalorder %s300, 6
        %s302 = scalar_select %p301, %s300, 6
        %s303 = smul.u32 128, %s302
        %p304 = scmp.eq.s32.totalorder %s26, 0
        // Predicated region
        $region45: #{tpu_custom_call.1} parent=31 // pred_check
          %p305 = pneg %p304
        $region46: #{tpu_custom_call.1} parent=31 // pred_check_branch
          %307 = sbr.rel (%p305) target = $region48
        $region47: #{tpu_custom_call.1} parent=31 // pred_region
          %308 = vst [vmem:[#allocation8] sm:$0x1] 0.0
        $region48: #{tpu_custom_call.1} parent=31 // pred_fallthru
          _
        %v309 = vld [vmem:[%s243] sm:$0xff]
        %v310 = vld [vmem:[%s243 + $0x8] sm:$0xff]
        %v311 = vld [vmem:[%s243 + $0x10] sm:$0xff]
        %v312 = vld [vmem:[%s243 + $0x18] sm:$0xff]
        %v313 = vld [vmem:[%s243 + $0x20] sm:$0xff]
        %v314 = vld [vmem:[%s243 + $0x28] sm:$0xff]
        %v315 = vld [vmem:[%s252] sm:$0xff]
        %v316 = vld [vmem:[%s252 + $0x8] sm:$0xff]
        %v317 = vld [vmem:[%s252 + $0x10] sm:$0xff]
        %v318 = vld [vmem:[%s252 + $0x18] sm:$0xff]
        %v319 = vld [vmem:[%s252 + $0x20] sm:$0xff]
        %v320 = vld [vmem:[%s252 + $0x28] sm:$0xff]
        %v321 = vld [vmem:[%s261] sm:$0xff]
        %v322 = vld [vmem:[%s261 + $0x8] sm:$0xff]
        %v323 = vld [vmem:[%s261 + $0x10] sm:$0xff]
        %v324 = vld [vmem:[%s261 + $0x18] sm:$0xff]
        %v325 = vld [vmem:[%s261 + $0x20] sm:$0xff]
        %v326 = vld [vmem:[%s261 + $0x28] sm:$0xff]
        %s327 = smul.u32 %s25, 11
        %s328 = sadd.s32 %s327, %s26
        %s329 = smul.u32 %s328, 48
        %v330 = vlaneseq
        %v331 = vshrl.u32 %v330, 7
        %v332 = vadd.s32 %v331, 8
        %v333 = vadd.s32 %v331, 16
        %v334 = vadd.s32 %v331, 24
        %v335 = vadd.s32 %v331, 32
        %v336 = vadd.s32 %v331, 40
        %v337 = vstv %s329
        %v338 = vadd.s32 %v337, %v331
        %v339 = vadd.s32 %v337, %v332
        %v340 = vadd.s32 %v337, %v333
        %v341 = vadd.s32 %v337, %v334
        %v342 = vadd.s32 %v337, %v335
        %v343 = vadd.s32 %v337, %v336
        %vm344 = vcmp.lt.s32.totalorder %v338, 512
        %vm345 = vcmp.lt.s32.totalorder %v339, 512
        %vm346 = vcmp.lt.s32.totalorder %v340, 512
        %vm347 = vcmp.lt.s32.totalorder %v341, 512
        %vm348 = vcmp.lt.s32.totalorder %v342, 512
        %vm349 = vcmp.lt.s32.totalorder %v343, 512
        %vm350 = vcmask 154624
        %v351 = vsel %vm350, %v309, -inf
        %352 = vmax.xlane.f32.xlu0 %v351
        %v353 = vpop.xlane.xlu0 %352
        %v354 = vsel %vm350, %v310, -inf
        %355 = vmax.xlane.f32.xlu0 %v354
        %v356 = vpop.xlane.xlu0 %355
        %v357 = vsel %vm350, %v311, -inf
        %358 = vmax.xlane.f32.xlu0 %v357
        %v359 = vpop.xlane.xlu0 %358
        %v360 = vsel %vm350, %v312, -inf
        %361 = vmax.xlane.f32.xlu0 %v360
        %v362 = vpop.xlane.xlu0 %361
        %v363 = vsel %vm350, %v313, -inf
        %364 = vmax.xlane.f32.xlu0 %v363
        %v365 = vpop.xlane.xlu0 %364
        %v366 = vsel %vm350, %v314, -inf
        %367 = vmax.xlane.f32.xlu0 %v366
        %v368 = vpop.xlane.xlu0 %367
        %v369 = vsub.f32 %v309, %v353
        %v370 = vsub.f32 %v310, %v356
        %v371 = vsub.f32 %v311, %v359
        %v372 = vsub.f32 %v312, %v362
        %v373 = vsub.f32 %v313, %v365
        %v374 = vsub.f32 %v314, %v368
        %v375 = vmul.f32 %v369, 1.442695
        %v376 = vpow.pop %v375
        %v377 = vmul.f32 %v370, 1.442695
        %v378 = vpow.pop %v377
        %v379 = vmul.f32 %v371, 1.442695
        %v380 = vpow.pop %v379
        %v381 = vmul.f32 %v372, 1.442695
        %v382 = vpow.pop %v381
        %v383 = vmul.f32 %v373, 1.442695
        %v384 = vpow.pop %v383
        %v385 = vmul.f32 %v374, 1.442695
        %v386 = vpow.pop %v385
        %v387 = vsel %vm350, %v376, 0.0
        %388 = vadd.xlane.f32.xlu0 %v387
        %v389 = vpop.xlane.xlu0 %388
        %v390 = vsel %vm350, %v378, 0.0
        %391 = vadd.xlane.f32.xlu0 %v390
        %v392 = vpop.xlane.xlu0 %391
        %v393 = vsel %vm350, %v380, 0.0
        %394 = vadd.xlane.f32.xlu0 %v393
        %v395 = vpop.xlane.xlu0 %394
        %v396 = vsel %vm350, %v382, 0.0
        %397 = vadd.xlane.f32.xlu0 %v396
        %v398 = vpop.xlane.xlu0 %397
        %v399 = vsel %vm350, %v384, 0.0
        %400 = vadd.xlane.f32.xlu0 %v399
        %v401 = vpop.xlane.xlu0 %400
        %v402 = vsel %vm350, %v386, 0.0
        %403 = vadd.xlane.f32.xlu0 %v402
        %v404 = vpop.xlane.xlu0 %403
        %v405 = vlog2.pop %v389
        %v406 = vmul.f32 %v405, 0.6931472
        %v407 = vlog2.pop %v392
        %v408 = vmul.f32 %v407, 0.6931472
        %v409 = vlog2.pop %v395
        %v410 = vmul.f32 %v409, 0.6931472
        %v411 = vlog2.pop %v398
        %v412 = vmul.f32 %v411, 0.6931472
        %v413 = vlog2.pop %v401
        %v414 = vmul.f32 %v413, 0.6931472
        %v415 = vlog2.pop %v404
        %v416 = vmul.f32 %v415, 0.6931472
        %v417 = vadd.f32 %v353, %v406
        %v418 = vadd.f32 %v356, %v408
        %v419 = vadd.f32 %v359, %v410
        %v420 = vadd.f32 %v362, %v412
        %v421 = vadd.f32 %v365, %v414
        %v422 = vadd.f32 %v368, %v416
        %v423 = vlaneseq
        %v424 = vand.u32 %v423, 127
        %425 = vset.pattern.permute.xlu0 0
        %426 = vperm.xlu0 %425, %v315
        %v427 = vpop.permute.xlu0 %426
        %428 = vset.pattern.permute.xlu0 0
        %429 = vperm.xlu0 %428, %v316
        %v430 = vpop.permute.xlu0 %429
        %431 = vset.pattern.permute.xlu0 0
        %432 = vperm.xlu0 %431, %v317
        %v433 = vpop.permute.xlu0 %432
        %434 = vset.pattern.permute.xlu0 0
        %435 = vperm.xlu0 %434, %v318
        %v436 = vpop.permute.xlu0 %435
        %437 = vset.pattern.permute.xlu0 0
        %438 = vperm.xlu0 %437, %v319
        %v439 = vpop.permute.xlu0 %438
        %440 = vset.pattern.permute.xlu0 0
        %441 = vperm.xlu0 %440, %v320
        %v442 = vpop.permute.xlu0 %441
        %vm443 = vcmp.eq.s32.totalorder %v424, %v427
        %vm444 = vcmp.eq.s32.totalorder %v424, %v430
        %vm445 = vcmp.eq.s32.totalorder %v424, %v433
        %vm446 = vcmp.eq.s32.totalorder %v424, %v436
        %vm447 = vcmp.eq.s32.totalorder %v424, %v439
        %vm448 = vcmp.eq.s32.totalorder %v424, %v442
        %v449 = vsel %vm443, %v309, 0.0
        %v450 = vsel %vm444, %v310, 0.0
        %v451 = vsel %vm445, %v311, 0.0
        %v452 = vsel %vm446, %v312, 0.0
        %v453 = vsel %vm447, %v313, 0.0
        %v454 = vsel %vm448, %v314, 0.0
        %v455 = vsel %vm350, %v449, 0.0
        %456 = vadd.xlane.f32.xlu0 %v455
        %v457 = vpop.xlane.xlu0 %456
        %v458 = vsel %vm350, %v450, 0.0
        %459 = vadd.xlane.f32.xlu0 %v458
        %v460 = vpop.xlane.xlu0 %459
        %v461 = vsel %vm350, %v451, 0.0
        %462 = vadd.xlane.f32.xlu0 %v461
        %v463 = vpop.xlane.xlu0 %462
        %v464 = vsel %vm350, %v452, 0.0
        %465 = vadd.xlane.f32.xlu0 %v464
        %v466 = vpop.xlane.xlu0 %465
        %v467 = vsel %vm350, %v453, 0.0
        %468 = vadd.xlane.f32.xlu0 %v467
        %v469 = vpop.xlane.xlu0 %468
        %v470 = vsel %vm350, %v454, 0.0
        %471 = vadd.xlane.f32.xlu0 %v470
        %v472 = vpop.xlane.xlu0 %471
        %v473 = vsub.f32 %v417, %v457
        %v474 = vsub.f32 %v418, %v460
        %v475 = vsub.f32 %v419, %v463
        %v476 = vsub.f32 %v420, %v466
        %v477 = vsub.f32 %v421, %v469
        %v478 = vsub.f32 %v422, %v472
        %v479 = vmul.f32 %v321, %v473
        %v480 = vmul.f32 %v322, %v474
        %v481 = vmul.f32 %v323, %v475
        %v482 = vmul.f32 %v324, %v476
        %v483 = vmul.f32 %v325, %v477
        %v484 = vmul.f32 %v326, %v478
        %v485 = vsel %vm344, %v479, 0.0
        %v486 = vsel %vm345, %v480, 0.0
        %v487 = vsel %vm346, %v481, 0.0
        %v488 = vsel %vm347, %v482, 0.0
        %v489 = vsel %vm348, %v483, 0.0
        %v490 = vsel %vm349, %v484, 0.0
        %v491 = vsel %vm344, %v321, 0.0
        %v492 = vsel %vm345, %v322, 0.0
        %v493 = vsel %vm346, %v323, 0.0
        %v494 = vsel %vm347, %v324, 0.0
        %v495 = vsel %vm348, %v325, 0.0
        %v496 = vsel %vm349, %v326, 0.0
        %vm497 = vcmask 7168
        %v498 = vsel %vm497, %v485, 0.0
        %v499 = vsel %vm497, %v486, 0.0
        %v500 = vadd.f32 %v498, %v499
        %v501 = vsel %vm497, %v487, 0.0
        %v502 = vadd.f32 %v500, %v501
        %v503 = vsel %vm497, %v488, 0.0
        %v504 = vadd.f32 %v502, %v503
        %v505 = vsel %vm497, %v489, 0.0
        %v506 = vadd.f32 %v504, %v505
        %v507 = vsel %vm497, %v490, 0.0
        %v508 = vadd.f32 %v506, %v507
        %509 = vadd.xlane.f32.xlu0 %v508
        %v510 = vpop.xlane.xlu0 %509
        %v511 = vrot.slane %v510, 4
        %v512 = vadd.f32 %v510, %v511
        %v513 = vrot.slane %v512, 2
        %v514 = vadd.f32 %v512, %v513
        %v515 = vrot.slane %v514, 1
        %v516 = vadd.f32 %v514, %v515
        %s517 = vtos %v516
        %v518 = vsel %vm497, %v491, 0.0
        %v519 = vsel %vm497, %v492, 0.0
        %v520 = vadd.f32 %v518, %v519
        %v521 = vsel %vm497, %v493, 0.0
        %v522 = vadd.f32 %v520, %v521
        %v523 = vsel %vm497, %v494, 0.0
        %v524 = vadd.f32 %v522, %v523
        %v525 = vsel %vm497, %v495, 0.0
        %v526 = vadd.f32 %v524, %v525
        %v527 = vsel %vm497, %v496, 0.0
        %v528 = vadd.f32 %v526, %v527
        %529 = vadd.xlane.f32.xlu0 %v528
        %v530 = vpop.xlane.xlu0 %529
        %v531 = vrot.slane %v530, 4
        %v532 = vadd.f32 %v530, %v531
        %v533 = vrot.slane %v532, 2
        %v534 = vadd.f32 %v532, %v533
        %v535 = vrot.slane %v534, 1
        %v536 = vadd.f32 %v534, %v535
        %s537 = vtos %v536
        %v538 = vld [vmem:[#allocation8] sm:$0x1]
        %vm539 = vcmp.eq.s32.totalorder %v424, 0
        %vm540 = vcmp.eq.s32.totalorder %v424, 1
        %v541 = vstv %s537
        %v542 = vsel %vm540, %v541, 0.0
        %v543 = vstv %s517
        %v544 = vsel %vm539, %v543, %v542
        %v545 = vadd.f32 %v538, %v544
        %546 = vst [vmem:[#allocation8] sm:$0x1] %v545
        // Predicated region
        $region49: #{tpu_custom_call.1} parent=31 // pred_check
          %p547 = pneg %p129
        $region50: #{tpu_custom_call.1} parent=31 // pred_check_branch
          %549 = sbr.rel (%p547) target = $region52
        $region51: #{tpu_custom_call.1} parent=31 // pred_region
          %s551 = ssub.s32 16, 16
          %552 = vsyncadd [#allocation4], %s551
          %s553 = smul.addr %s25, 16
          %s554 = scalar_lea.hbm %s3, %s553
          %s556 = sshll.u32 [#allocation8], 4
          %s557 = int_to_ptr.vmem [resolvable:$true] %s556
          %559 = dma.vmem_to_hbm [thread:$0]  %s557, 16, %s554, [#allocation4]
        $region52: #{tpu_custom_call.1} parent=31 // pred_fallthru
          _
        // Predicated region
        $region53: #{tpu_custom_call.1} parent=31 // pred_check
          %p560 = pneg %p129
        $region54: #{tpu_custom_call.1} parent=31 // pred_check_branch
          %562 = sbr.rel (%p560) target = $region56
        $region55: #{tpu_custom_call.1} parent=31 // pred_region
          %563 = dma.done [#allocation4], 16
        $region56: #{tpu_custom_call.1} parent=31 // pred_fallthru
          _
      $region32: #{tpu_custom_call.1} parent=5 // pred_fallthru
        _
      %p564 = scmp.le.s32.totalorder 2, %s16
      // Predicated region
      $region57: #{tpu_custom_call.1} parent=5 // pred_check
        %p565 = pneg %p564
      $region58: #{tpu_custom_call.1} parent=5 // pred_check_branch
        %567 = sbr.rel (%p565) target = $region60
      $region59: #{tpu_custom_call.1} parent=5 // pred_region
        %s568 = ssub.s32 %s16, 2
      $region60: #{tpu_custom_call.1} parent=5 // pred_fallthru
        _
    $region6: #{tpu_custom_call.1} parent=1 // loop_footer
      %s20 = sadd.s32 1, %s16
    $region7: #{tpu_custom_call.1} parent=1 // loop_footer_branch
      %15 = sbr.rel target = $region3
    $region8: #{tpu_custom_call.1} parent=1 // loop_exit
      _
    %569 = vsyncpa [#allocation3], 1
    %s570 = scalar_lea.sflag [#allocation3], 1
    %571 = vsyncpa %s570, 1
    %572 = vsyncpa [#allocation6], 1
    %s573 = scalar_lea.sflag [#allocation6], 1
    %574 = vsyncpa %s573, 1
    %575 = vsyncpa [#allocation4], 1
    %s576 = scalar_lea.sflag [#allocation4], 1
    %577 = vsyncpa %s576, 1

</llo_original>
